<compile_context>
chip_gen: v7x
topology: tpu7x:2x2x1
jax: 0.10.0
libtpu: 0.0.40
codegen_flags: <defaults>
</compile_context>

<pallas_src>
import math

import jax
import jax.numpy as jnp
from jax.experimental import pallas as pl
from jax.experimental.pallas import tpu as pltpu


# ---------------------------------------------------------------------------
# Kernels
# ---------------------------------------------------------------------------
def _alias_noop_kernel(x_ref, o_ref):
    # Output buffer is aliased to the input buffer: nothing to move.
    # `touch` pins a fake read/write so the aliased output is treated as
    # produced by this kernel (no reordering / DCE of the custom call).
    del x_ref
    pltpu.touch(o_ref)


def _dma_copy_kernel(x_ref, o_ref, sem):
    # One whole-array HBM->HBM DMA: no VMEM staging, no per-step overhead.
    cp = pltpu.make_async_copy(x_ref, o_ref, sem)
    cp.start()
    cp.wait()


# ---------------------------------------------------------------------------
# pallas_call wrappers
# ---------------------------------------------------------------------------
def _view_alias(x):
    """Zero-copy identity: output aliases the input buffer (input donated)."""
    return pl.pallas_call(
        _alias_noop_kernel,
        out_shape=jax.ShapeDtypeStruct(x.shape, x.dtype),
        in_specs=[pl.BlockSpec(memory_space=pl.ANY)],
        out_specs=pl.BlockSpec(memory_space=pl.ANY),
        input_output_aliases={0: 0},
        compiler_params=pltpu.CompilerParams(has_side_effects=True),
    )(x)


def _view_dma_copy(x):
    """Non-donating fallback: single descriptor-level HBM->HBM DMA copy."""
    nbytes = x.size * x.dtype.itemsize
    return pl.pallas_call(
        _dma_copy_kernel,
        out_shape=jax.ShapeDtypeStruct(x.shape, x.dtype),
        in_specs=[pl.BlockSpec(memory_space=pl.ANY)],
        out_specs=pl.BlockSpec(memory_space=pl.ANY),
        scratch_shapes=[pltpu.SemaphoreType.DMA(())],
        cost_estimate=pl.CostEstimate(
            flops=0, transcendentals=0, bytes_accessed=2 * nbytes),
    )(x)


def pallas_view(x, shape, *, donate=True):
    """Equivalent of View(shape)(x) == x.view(-1, *shape[1:])."""
    tail = tuple(int(s) for s in shape[1:])
    if any(s == -1 for s in tail):
        raise ValueError("only the leading dim of View's shape may be -1")
    total = math.prod(x.shape)
    tail_prod = math.prod(tail) if tail else 1
    assert tail_prod > 0 and total % tail_prod == 0, \
        "view shape incompatible with input size"
    out_shape = (total // tail_prod,) + tail

    # The view itself is pure metadata (row-major, matching torch.Tensor.view
    # on contiguous tensors) -> free reshape in the wrapper.
    y = jnp.reshape(x, out_shape)
    if total == 0:
        return y

    if donate:
        try:
            return _view_alias(y)
        except Exception:
            # Aliased no-op unavailable on this runtime: fall back to the
            # single HBM->HBM DMA copy (still no VMEM staging).
            return _view_dma_copy(y)
    return _view_dma_copy(y)


if __name__ == "__main__":
    key = jax.random.PRNGKey(0)
    # NCHW input: batch=2, channels=4, spatial=16x16
    x = jax.random.normal(key, (2, 4, 16, 16), dtype=jnp.float32)

    # View(shape=(-1, 1024)) -> flattens each example to a 1024-vector.
    target_shape = (-1, 4 * 16 * 16)

    # Reference computed (and materialized) first so it never depends on the
    # input buffer after the aliasing kernel runs.
    ref = jax.block_until_ready(
        jnp.reshape(x, (-1,) + tuple(target_shape[1:])))

    # Zero-copy (aliased) path.
    out = jax.block_until_ready(pallas_view(x, target_shape, donate=True))
    assert out.shape == (2, 1024), out.shape
    assert out.dtype == x.dtype
    assert bool(jnp.array_equal(out, ref))

    # Non-donating path: single HBM->HBM DMA copy.
    out2 = jax.block_until_ready(pallas_view(x, target_shape, donate=False))
    assert out2.shape == (2, 1024), out2.shape
    assert out2.dtype == x.dtype
    assert bool(jnp.array_equal(out2, ref))

    print("KERNEL_OK")
</pallas_src>

<mosaic_0001>
module attributes {stable_mosaic.version = 11 : i64} {
  func.func @_alias_noop_kernel(%arg0: memref<2x1024xf32, #tpu.memory_space<any>>, %arg1: memref<2x1024xf32, #tpu.memory_space<any>>) attributes {dimension_semantics = [], scalar_prefetch = 0 : i64, scratch_operands = 0 : i64, tpu.core_type = #tpu.core_type<tc>} {
    return
  }
}

module attributes {stable_mosaic.version = 11 : i64} {
  func.func @_dma_copy_kernel(%arg0: memref<2x1024xf32, #tpu.memory_space<any>>, %arg1: memref<2x1024xf32, #tpu.memory_space<any>>, %arg2: memref<!tpu.dma_semaphore, #tpu.memory_space<semaphore_mem>>) attributes {dimension_semantics = [], scalar_prefetch = 0 : i64, scratch_operands = 1 : i64, tpu.core_type = #tpu.core_type<tc>} {
    tpu.enqueue_dma source(%arg0 : memref<2x1024xf32, #tpu.memory_space<any>>) target(%arg1 : memref<2x1024xf32, #tpu.memory_space<any>>) target_semaphore(%arg2 : memref<!tpu.dma_semaphore, #tpu.memory_space<semaphore_mem>>)
    tpu.wait_dma2 semaphore(%arg2 : memref<!tpu.dma_semaphore, #tpu.memory_space<semaphore_mem>>) src(%arg0 : memref<2x1024xf32, #tpu.memory_space<any>>) dst(%arg1 : memref<2x1024xf32, #tpu.memory_space<any>>)
    return
  }
}

</mosaic_0001>

<llo_original>
// kernel: tpu_custom_call.1
$region0: #{tpu_custom_call.1}
  #allocation0 [shape = 'u32[]', space=smem, size = 0x4, offset = 0x4, fixed_abs, tag = 'smem constant byte address 0x4 - core index']
  #allocation1 [shape = 'u32[144,128]{1,0:T(1,128)}', space=vmem, size = 0x12000, scoped, tag = 'internal scratch']
  %s0 = inlined_call_operand.hbm [shape: f32[2,1024], index: 0, kind: input, shape index: {}, may-alias: {0,1}]
  %s1 = inlined_call_operand.hbm [shape: f32[2,1024], index: 1, kind: output, shape index: {}, may-alias: {0,1}]
  %s2 = sld [smem:[#allocation0]]
  $region2: #{tpu_custom_call.1} parent=0
    _
  %s4 = ssub.s32 1, %s2
  %s5 = scalar_select 0, %s4, %s2

// kernel: tpu_custom_call.1
$region0: #{tpu_custom_call.1}
  #allocation0 [shape = 'u32[]', space=smem, size = 0x4, offset = 0x4, fixed_abs, tag = 'smem constant byte address 0x4 - core index']
  #allocation1 [shape = 'u32[144,128]{1,0:T(1,128)}', space=vmem, size = 0x12000, scoped, tag = 'internal scratch']
  #allocation2 [shape = 's32[1]{0}', space=sflag, size = 0x4, scoped, tag = 'scratch operand']
  #allocation3 [shape = 's32[]', space=sflag, size = 0x4, offset = 0, fixed_abs, tag = 'sflag constant byte address 0x0 - dummy sync flag']
  #allocation4 [shape = 'u32[0]{0}', space=smem, size = 0, offset = 0, fixed_abs, tag = 'smem constant byte address 0x0 - null']
  %s0 = inlined_call_operand.hbm [shape: f32[2,1024], index: 0, kind: input, shape index: {}]
  %s1 = inlined_call_operand.hbm [shape: f32[2,1024], index: 1, kind: output, shape index: {}]
  %s2 = sld [smem:[#allocation0]]
  $region2: #{tpu_custom_call.1} parent=0
    _
  %s4 = ssub.s32 1, %s2
  %s5 = scalar_select 0, %s4, %s2
  %s7 = sshll.u32 1, 14
  %s8 = sxor.u32 4294967295, %s7
  %s11 = sshll.u32 3, 24
  %s12 = sxor.u32 4294967295, %s11
  %s13 = sand.u32 0, %s12
  %s15 = sor.u32 %s13, 0
  %18 = dma.general %s0, 256, %s1, [#allocation2], [#allocation3], [#allocation4], %s15, 0
  %s19 = smul.u32 2, 1
  %s20 = smul.u32 %s19, 8
  %s21 = sshll.u32 %s20, 4
  %22 = dma.done [#allocation2], %s21
  %23 = vsyncmov [#allocation2]
  %s24 = vpop.sfrf %23
  %p25 = scmp.eq.s32.totalorder %s24, 0
  %p26 = pneg %p25
  %28 = shalt.err (%p26)

</llo_original>
